<compile_context>
chip_gen: v7x
topology: tpu7x:2x2x1
jax: 0.10.0
libtpu: 0.0.40
codegen_flags: <defaults>
</compile_context>

<pallas_src>
import functools

import jax
import jax.numpy as jnp
from jax.experimental import pallas as pl
from jax.experimental.pallas import tpu as pltpu


def _round_up(n, m):
    return ((n + m - 1) // m) * m


# ---------------------------------------------------------------------------
# Kernels
# ---------------------------------------------------------------------------

def _kernel_resident(x_ref, w1_ref, shift_ref, w2_ref, b2_ref, out_ref):
    # x:     [TB, Cin_p]      bf16
    # w1:    [Cin_p, Mid_p]   bf16 (BN scale folded in), VMEM-resident
    # shift: [1, Mid_p]       f32  (folded BN shift + linear1 bias)
    # w2:    [Mid_p, Nc_p]    bf16, VMEM-resident
    # b2:    [1, Nc_p]        f32
    h = jnp.dot(x_ref[...], w1_ref[...], preferred_element_type=jnp.float32)
    h = jnp.maximum(h + shift_ref[...], 0.0)                       # affine + ReLU (f32)
    out = jnp.dot(h.astype(w2_ref.dtype), w2_ref[...],
                  preferred_element_type=jnp.float32) + b2_ref[...]
    out_ref[...] = out.astype(out_ref.dtype)


def _kernel_mid_tiled(x_ref, w1_ref, shift_ref, w2_ref, b2_ref, out_ref, acc_ref):
    # Weights streamed in mid-sized slices; ReLU is element-wise over mid, so
    # partial relu(x@w1_j + shift_j) @ w2_j contributions sum exactly.
    j = pl.program_id(1)

    @pl.when(j == 0)
    def _():
        acc_ref[...] = jnp.zeros_like(acc_ref)

    h = jnp.dot(x_ref[...], w1_ref[...], preferred_element_type=jnp.float32)
    h = jnp.maximum(h + shift_ref[...], 0.0)
    acc_ref[...] += jnp.dot(h.astype(w2_ref.dtype), w2_ref[...],
                            preferred_element_type=jnp.float32)

    @pl.when(j == pl.num_programs(1) - 1)
    def _():
        out_ref[...] = (acc_ref[...] + b2_ref[...]).astype(out_ref.dtype)


# ---------------------------------------------------------------------------
# One-time (model-load) parameter preparation
# ---------------------------------------------------------------------------

def prepare_classifier_params(params):
    """BN fold, transpose, 128-pad, bf16 cast — done once at model load."""
    w1 = jnp.asarray(params["w1"], jnp.float32)        # [mid, in]
    b1 = jnp.asarray(params["b1"], jnp.float32)        # [mid]
    gamma = jnp.asarray(params["bn_gamma"], jnp.float32)
    beta = jnp.asarray(params["bn_beta"], jnp.float32)
    rmean = jnp.asarray(params["bn_mean"], jnp.float32)
    rvar = jnp.asarray(params["bn_var"], jnp.float32)
    eps = params["bn_eps"]
    w2 = jnp.asarray(params["w2"], jnp.float32)        # [n_class, mid]
    b2 = jnp.asarray(params["b2"], jnp.float32)        # [n_class]

    mid, cin = w1.shape
    ncls = w2.shape[0]

    # BN eval-mode fold, in f32 *before* the bf16 cast.
    scale = gamma / jnp.sqrt(rvar + eps)                # [mid]
    shift = (b1 - rmean) * scale + beta                 # [mid]
    w1_folded = w1.T * scale[None, :]                   # [in, mid]
    w2_t = w2.T                                         # [mid, n_class]

    cin_p = _round_up(cin, 128)
    mid_p = _round_up(mid, 128)
    ncls_p = _round_up(ncls, 128)

    # Zero padding is exact: padded mid columns have zero weight & zero shift
    # (ReLU(0)=0 and matching padded w2 rows are zero); padded n_class columns
    # are sliced off in the wrapper.
    w1_p = jnp.zeros((cin_p, mid_p), jnp.float32).at[:cin, :mid].set(w1_folded)
    shift_p = jnp.zeros((1, mid_p), jnp.float32).at[0, :mid].set(shift)
    w2_p = jnp.zeros((mid_p, ncls_p), jnp.float32).at[:mid, :ncls].set(w2_t)
    b2_p = jnp.zeros((1, ncls_p), jnp.float32).at[0, :ncls].set(b2)

    w1_bf16 = w1_p.astype(jnp.bfloat16)
    # One-time range check: BN-scale folding must not overflow bf16.
    assert bool(jnp.isfinite(w1_bf16.astype(jnp.float32)).all()), (
        "folded w1 overflows bf16 range (pathological gamma/var)")

    return {
        "w1": w1_bf16,
        "shift": shift_p,                               # f32 epilogue
        "w2": w2_p.astype(jnp.bfloat16),
        "b2": b2_p,                                     # f32 epilogue
        "cin": cin, "mid": mid, "ncls": ncls,
        "cin_p": cin_p, "mid_p": mid_p, "ncls_p": ncls_p,
    }


# ---------------------------------------------------------------------------
# Forward
# ---------------------------------------------------------------------------

def _vmem_budget_bytes():
    """Generation-aware VMEM budget (80% of physical capacity)."""
    try:
        cap = int(pltpu.get_tpu_info().vmem_capacity_bytes)
    except Exception:
        cap = 64 * 1024 * 1024      # conservative (v7x-sized) fallback
    return int(cap * 0.80)


def _pallas_forward(x_p, w1, shift, w2, b2, *, tb, tm, vmem_limit, out_dtype,
                    single_buffer_consts):
    b_p, cin_p = x_p.shape
    mid_p, ncls_p = w2.shape
    nb = b_p // tb
    nm = mid_p // tm
    out_sz = jnp.dtype(out_dtype).itemsize

    # Constant-index (resident) operands don't need a second pipeline buffer:
    # halves their VMEM footprint (matters most on v7x's 64 MiB VMEM).
    const_kwargs = {"pipeline_mode": pl.Buffered(1)} if single_buffer_consts else {}

    flops = 2 * b_p * (cin_p * mid_p + mid_p * ncls_p)

    if nm == 1:
        kernel = _kernel_resident
        grid = (nb,)
        in_specs = [
            pl.BlockSpec((tb, cin_p), lambda i: (i, 0)),                      # x tile
            pl.BlockSpec((cin_p, mid_p), lambda i: (0, 0), **const_kwargs),   # w1 resident
            pl.BlockSpec((1, mid_p), lambda i: (0, 0), **const_kwargs),       # shift
            pl.BlockSpec((mid_p, ncls_p), lambda i: (0, 0), **const_kwargs),  # w2 resident
            pl.BlockSpec((1, ncls_p), lambda i: (0, 0), **const_kwargs),      # b2
        ]
        out_specs = pl.BlockSpec((tb, ncls_p), lambda i: (i, 0))
        scratch_shapes = []
        dim_sem = ("parallel",)
        bytes_accessed = (x_p.size * 2 + w1.size * 2 + w2.size * 2
                          + shift.size * 4 + b2.size * 4 + b_p * ncls_p * out_sz)
    else:
        kernel = _kernel_mid_tiled
        grid = (nb, nm)                                  # reduction (mid) axis last
        in_specs = [
            pl.BlockSpec((tb, cin_p), lambda i, j: (i, 0)),
            pl.BlockSpec((cin_p, tm), lambda i, j: (0, j)),
            pl.BlockSpec((1, tm), lambda i, j: (0, j)),
            pl.BlockSpec((tm, ncls_p), lambda i, j: (j, 0)),
            pl.BlockSpec((1, ncls_p), lambda i, j: (0, 0), **const_kwargs),
        ]
        out_specs = pl.BlockSpec((tb, ncls_p), lambda i, j: (i, 0))
        scratch_shapes = [pltpu.VMEM((tb, ncls_p), jnp.float32)]
        dim_sem = ("parallel", "arbitrary")
        bytes_accessed = (x_p.size * 2
                          + nb * (w1.size * 2 + w2.size * 2 + shift.size * 4)
                          + b2.size * 4 + b_p * ncls_p * out_sz)

    return pl.pallas_call(
        kernel,
        out_shape=jax.ShapeDtypeStruct((b_p, ncls_p), out_dtype),
        grid_spec=pltpu.PrefetchScalarGridSpec(
            num_scalar_prefetch=0,
            grid=grid,
            in_specs=in_specs,
            out_specs=out_specs,
            scratch_shapes=scratch_shapes,
        ),
        compiler_params=pltpu.CompilerParams(
            dimension_semantics=dim_sem,
            vmem_limit_bytes=int(vmem_limit),
        ),
        cost_estimate=pl.CostEstimate(
            flops=int(flops), transcendentals=0,
            bytes_accessed=int(bytes_accessed)),
    )(x_p, w1, shift, w2, b2)


def classifier_forward(x, prepared, *, out_dtype=jnp.float32,
                       force_batch_tile=None, force_mid_tile=None):
    """x: [B, in_channel] (1-D input is unsqueezed to [1, in_channel])."""
    if x.ndim < 2:
        x = x[None, :]
    B, cin = x.shape
    assert cin == prepared["cin"]

    cin_p = prepared["cin_p"]
    mid_p = prepared["mid_p"]
    ncls_p = prepared["ncls_p"]

    budget = _vmem_budget_bytes()

    # ---- mid (hidden) tile: keep both weight matrices VMEM-resident when they
    # fit this generation's budget (128 MiB v5e/v6e, 64 MiB v7x); otherwise
    # stream 128-multiple mid slices with an f32 accumulator (v7x large heads).
    if force_mid_tile is not None:
        tm = min(force_mid_tile, mid_p)
    else:
        resident_bytes = cin_p * mid_p * 2 + mid_p * ncls_p * 2 + mid_p * 4 + ncls_p * 4
        min_io = 2 * (128 * cin_p * 2 + 128 * ncls_p * 4)   # double-buffered x/out @ tb=128
        if resident_bytes + min_io <= budget:
            tm = mid_p
        else:
            per_mid = 2 * (cin_p * 2 + ncls_p * 2 + 4)       # dbl-buffered w1 col + w2 row + shift
            avail = budget - min_io - 128 * ncls_p * 4 - ncls_p * 4  # minus acc scratch + b2
            tm = max(128, min(mid_p, (avail // max(per_mid, 1)) // 128 * 128))
    while mid_p % tm:
        tm -= 128
    nm = mid_p // tm
    tiled = nm > 1

    # ---- batch tile: largest multiple of 16 (bf16 packs 16 sublanes/vreg) that
    # fits the remaining VMEM, capped at 512 rows; prefer >= 2 grid steps when
    # there's enough work so v7x megacore can split the batch across its 2 TCs.
    if tiled:
        w_bytes = 2 * (cin_p * tm * 2 + tm * ncls_p * 2 + tm * 4) + ncls_p * 4
    else:
        w_bytes = cin_p * mid_p * 2 + mid_p * ncls_p * 2 + mid_p * 4 + ncls_p * 4
    out_sz = jnp.dtype(out_dtype).itemsize
    row_bytes = 2 * (cin_p * 2 + ncls_p * out_sz) + (ncls_p * 4 if tiled else 0)
    tb_cap = max(16, min(512, ((budget - w_bytes) // max(row_bytes, 1)) // 16 * 16))
    b16 = _round_up(max(B, 1), 16)
    if force_batch_tile is not None:
        tb = force_batch_tile
    else:
        tb = min(tb_cap, b16)
        if b16 >= 256 and b16 // tb < 2:
            tb = min(tb_cap, max(128, _round_up(-(-b16 // 2), 16)))
    b_p = _round_up(B, tb)

    # ---- pad / cast x only when needed: when shapes are already aligned the
    # activation goes straight to the kernel (no extra HBM read+write pass).
    x_b = x if x.dtype == jnp.bfloat16 else x.astype(jnp.bfloat16)
    if b_p == B and cin_p == cin:
        x_p = x_b
    else:
        x_p = jnp.pad(x_b, ((0, b_p - B), (0, cin_p - cin)))

    run = functools.partial(
        _pallas_forward, x_p, prepared["w1"], prepared["shift"],
        prepared["w2"], prepared["b2"],
        tb=tb, tm=tm, vmem_limit=budget, out_dtype=out_dtype)
    try:
        out = run(single_buffer_consts=True)
    except Exception:
        # `pipeline_mode=pl.Buffered(1)` is a buffering hint; fall back to the
        # default double-buffered specs if this JAX/Mosaic build rejects it.
        out = run(single_buffer_consts=False)

    return out[:B, :prepared["ncls"]]


# ---------------------------------------------------------------------------
# Reference + init (synthetic; no checkpoint load)
# ---------------------------------------------------------------------------

def init_params(key, in_channel, mid_channel, n_class):
    k1, k2, k3, k4 = jax.random.split(key, 4)
    w1 = jax.random.normal(k1, (mid_channel, in_channel), jnp.float32) * jnp.sqrt(
        2.0 / in_channel)
    b1 = jnp.zeros((mid_channel,), jnp.float32)
    w2 = jax.random.normal(k2, (n_class, mid_channel), jnp.float32) * jnp.sqrt(
        2.0 / mid_channel)
    b2 = jnp.zeros((n_class,), jnp.float32)
    # BatchNorm1d running stats / affine params (eval mode).
    bn_gamma = jnp.ones((mid_channel,), jnp.float32)
    bn_beta = jnp.zeros((mid_channel,), jnp.float32)
    bn_mean = 0.1 * jax.random.normal(k3, (mid_channel,), jnp.float32)
    bn_var = 1.0 + 0.1 * jax.nn.softplus(
        jax.random.normal(k4, (mid_channel,), jnp.float32))
    return {
        "w1": w1, "b1": b1, "w2": w2, "b2": b2,
        "bn_gamma": bn_gamma, "bn_beta": bn_beta,
        "bn_mean": bn_mean, "bn_var": bn_var, "bn_eps": 1e-5,
    }


def reference_forward(x, params):
    if x.ndim < 2:
        x = x[None, :]
    h = x @ params["w1"].T + params["b1"]
    h = (h - params["bn_mean"]) / jnp.sqrt(params["bn_var"] + params["bn_eps"])
    h = h * params["bn_gamma"] + params["bn_beta"]
    h = jnp.maximum(h, 0.0)
    return h @ params["w2"].T + params["b2"]


if __name__ == "__main__":
    root = jax.random.PRNGKey(0)

    def check(batch, in_channel, mid_channel, n_class, **fwd_kwargs):
        kx, kp = jax.random.split(
            jax.random.fold_in(root, batch * 1009 + in_channel))
        x = jax.random.normal(kx, (batch, in_channel), jnp.float32)
        params = init_params(kp, in_channel, mid_channel, n_class)
        prepared = prepare_classifier_params(params)   # one-time model-load work
        out = jax.block_until_ready(classifier_forward(x, prepared, **fwd_kwargs))
        ref = reference_forward(x, params)
        assert out.shape == (batch, n_class), out.shape
        # bf16 weight/activation path -> looser tolerance vs. f32 reference.
        assert jnp.allclose(out, ref, atol=1e-1, rtol=5e-2), (
            float(jnp.max(jnp.abs(out - ref))))

    # 1) Resident-weight path, every dim padded to 128.
    check(8, 32, 64, 8)
    # 2) Fully aligned shapes -> x is passed straight through (no wrapper pad pass).
    check(32, 128, 128, 8)
    # 3) Forced mid-tiled (accumulator) path + multi-step batch grid: exercises
    #    the v7x large-weight fallback on small shapes.
    check(40, 48, 256, 10, force_batch_tile=16, force_mid_tile=128)

    print("KERNEL_OK")
</pallas_src>

<mosaic_0001>
module attributes {stable_mosaic.version = 11 : i64} {
  func.func @_kernel_resident(%arg0: i32, %arg1: memref<16x128xbf16, #tpu.memory_space<vmem>>, %arg2: memref<128x128xbf16, #tpu.memory_space<vmem>>, %arg3: memref<1x128xf32, #tpu.memory_space<vmem>>, %arg4: memref<128x128xbf16, #tpu.memory_space<vmem>>, %arg5: memref<1x128xf32, #tpu.memory_space<vmem>>, %arg6: memref<16x128xf32, #tpu.memory_space<vmem>>) attributes {dimension_semantics = [#tpu.dimension_semantics<parallel>], iteration_bounds = array<i64: 1>, scalar_prefetch = 0 : i64, scratch_operands = 0 : i64, tpu.core_type = #tpu.core_type<tc>, window_params = [{transform_indices = @transform_0, window_bounds = array<i64: 16, 128>}, {pipeline_mode = #tpu.pipeline_mode<synchronous>, transform_indices = @transform_1, window_bounds = array<i64: 128, 128>}, {pipeline_mode = #tpu.pipeline_mode<synchronous>, transform_indices = @transform_2, window_bounds = array<i64: 1, 128>}, {pipeline_mode = #tpu.pipeline_mode<synchronous>, transform_indices = @transform_3, window_bounds = array<i64: 128, 128>}, {pipeline_mode = #tpu.pipeline_mode<synchronous>, transform_indices = @transform_4, window_bounds = array<i64: 1, 128>}, {transform_indices = @transform_5, window_bounds = array<i64: 16, 128>}]} {
    %c0 = arith.constant 0 : index
    %c0_0 = arith.constant 0 : index
    %0 = vector.load %arg1[%c0, %c0_0] : memref<16x128xbf16, #tpu.memory_space<vmem>>, vector<16x128xbf16>
    %c0_1 = arith.constant 0 : index
    %c0_2 = arith.constant 0 : index
    %1 = vector.load %arg2[%c0_1, %c0_2] : memref<128x128xbf16, #tpu.memory_space<vmem>>, vector<128x128xbf16>
    %cst = arith.constant dense<0.000000e+00> : vector<16x128xf32>
    %2 = tpu.matmul %0, %1, %cst {dimension_numbers = #tpu.dot_dimension_numbers<[1], [0], [0], [1], [0, 0, 1, 1], [], []>} : vector<16x128xbf16>, vector<128x128xbf16>, vector<16x128xf32> -> vector<16x128xf32>
    %c0_3 = arith.constant 0 : index
    %c0_4 = arith.constant 0 : index
    %3 = vector.load %arg3[%c0_3, %c0_4] : memref<1x128xf32, #tpu.memory_space<vmem>>, vector<1x128xf32>
    %4 = vector.broadcast %3 : vector<1x128xf32> to vector<16x128xf32>
    %5 = arith.addf %2, %4 : vector<16x128xf32>
    %cst_5 = arith.constant 0.000000e+00 : f32
    %6 = vector.broadcast %cst_5 : f32 to vector<16x128xf32>
    %7 = arith.maximumf %5, %6 : vector<16x128xf32>
    %8 = arith.truncf %7 : vector<16x128xf32> to vector<16x128xbf16>
    %c0_6 = arith.constant 0 : index
    %c0_7 = arith.constant 0 : index
    %9 = vector.load %arg4[%c0_6, %c0_7] : memref<128x128xbf16, #tpu.memory_space<vmem>>, vector<128x128xbf16>
    %cst_8 = arith.constant dense<0.000000e+00> : vector<16x128xf32>
    %10 = tpu.matmul %8, %9, %cst_8 {dimension_numbers = #tpu.dot_dimension_numbers<[1], [0], [0], [1], [0, 0, 1, 1], [], []>} : vector<16x128xbf16>, vector<128x128xbf16>, vector<16x128xf32> -> vector<16x128xf32>
    %c0_9 = arith.constant 0 : index
    %c0_10 = arith.constant 0 : index
    %11 = vector.load %arg5[%c0_9, %c0_10] : memref<1x128xf32, #tpu.memory_space<vmem>>, vector<1x128xf32>
    %12 = vector.broadcast %11 : vector<1x128xf32> to vector<16x128xf32>
    %13 = arith.addf %10, %12 : vector<16x128xf32>
    %c0_11 = arith.constant 0 : index
    %c0_12 = arith.constant 0 : index
    %14 = vector.load %arg6[%c0_11, %c0_12] : memref<16x128xf32, #tpu.memory_space<vmem>>, vector<16x128xf32>
    tpu.vector_store %arg6[%c0_11, %c0_12], %13 {strides = array<i32>} : memref<16x128xf32, #tpu.memory_space<vmem>>, vector<16x128xf32>,
    return
  }
  func.func @transform_0(%arg0: i32) -> (i32, i32) {
    %c0_i32 = arith.constant 0 : i32
    %c0_i32_0 = arith.constant 0 : i32
    return %arg0, %c0_i32 : i32, i32
  }
  func.func @transform_1(%arg0: i32) -> (i32, i32) {
    %c0_i32 = arith.constant 0 : i32
    %c0_i32_0 = arith.constant 0 : i32
    %c0_i32_1 = arith.constant 0 : i32
    return %c0_i32, %c0_i32_0 : i32, i32
  }
  func.func @transform_2(%arg0: i32) -> (i32, i32) {
    %c0_i32 = arith.constant 0 : i32
    %c0_i32_0 = arith.constant 0 : i32
    %c0_i32_1 = arith.constant 0 : i32
    return %c0_i32, %c0_i32_0 : i32, i32
  }
  func.func @transform_3(%arg0: i32) -> (i32, i32) {
    %c0_i32 = arith.constant 0 : i32
    %c0_i32_0 = arith.constant 0 : i32
    %c0_i32_1 = arith.constant 0 : i32
    return %c0_i32, %c0_i32_0 : i32, i32
  }
  func.func @transform_4(%arg0: i32) -> (i32, i32) {
    %c0_i32 = arith.constant 0 : i32
    %c0_i32_0 = arith.constant 0 : i32
    %c0_i32_1 = arith.constant 0 : i32
    return %c0_i32, %c0_i32_0 : i32, i32
  }
  func.func @transform_5(%arg0: i32) -> (i32, i32) {
    %c0_i32 = arith.constant 0 : i32
    %c0_i32_0 = arith.constant 0 : i32
    return %arg0, %c0_i32 : i32, i32
  }
}

module attributes {stable_mosaic.version = 11 : i64} {
  func.func @_kernel_resident(%arg0: i32, %arg1: memref<16x128xbf16, #tpu.memory_space<vmem>>, %arg2: memref<128x128xbf16, #tpu.memory_space<vmem>>, %arg3: memref<1x128xf32, #tpu.memory_space<vmem>>, %arg4: memref<128x128xbf16, #tpu.memory_space<vmem>>, %arg5: memref<1x128xf32, #tpu.memory_space<vmem>>, %arg6: memref<16x128xf32, #tpu.memory_space<vmem>>) attributes {dimension_semantics = [#tpu.dimension_semantics<parallel>], iteration_bounds = array<i64: 1>, scalar_prefetch = 0 : i64, scratch_operands = 0 : i64, tpu.core_type = #tpu.core_type<tc>, window_params = [{transform_indices = @transform_0, window_bounds = array<i64: 16, 128>}, {pipeline_mode = #tpu.pipeline_mode<synchronous>, transform_indices = @transform_1, window_bounds = array<i64: 128, 128>}, {pipeline_mode = #tpu.pipeline_mode<synchronous>, transform_indices = @transform_2, window_bounds = array<i64: 1, 128>}, {pipeline_mode = #tpu.pipeline_mode<synchronous>, transform_indices = @transform_3, window_bounds = array<i64: 128, 128>}, {pipeline_mode = #tpu.pipeline_mode<synchronous>, transform_indices = @transform_4, window_bounds = array<i64: 1, 128>}, {transform_indices = @transform_5, window_bounds = array<i64: 16, 128>}]} {
    %c0 = arith.constant 0 : index
    %c0_0 = arith.constant 0 : index
    %0 = vector.load %arg1[%c0, %c0_0] : memref<16x128xbf16, #tpu.memory_space<vmem>>, vector<16x128xbf16>
    %c0_1 = arith.constant 0 : index
    %c0_2 = arith.constant 0 : index
    %1 = vector.load %arg2[%c0_1, %c0_2] : memref<128x128xbf16, #tpu.memory_space<vmem>>, vector<128x128xbf16>
    %cst = arith.constant dense<0.000000e+00> : vector<16x128xf32>
    %2 = tpu.matmul %0, %1, %cst {dimension_numbers = #tpu.dot_dimension_numbers<[1], [0], [0], [1], [0, 0, 1, 1], [], []>} : vector<16x128xbf16>, vector<128x128xbf16>, vector<16x128xf32> -> vector<16x128xf32>
    %c0_3 = arith.constant 0 : index
    %c0_4 = arith.constant 0 : index
    %3 = vector.load %arg3[%c0_3, %c0_4] : memref<1x128xf32, #tpu.memory_space<vmem>>, vector<1x128xf32>
    %4 = vector.broadcast %3 : vector<1x128xf32> to vector<16x128xf32>
    %5 = arith.addf %2, %4 : vector<16x128xf32>
    %cst_5 = arith.constant 0.000000e+00 : f32
    %6 = vector.broadcast %cst_5 : f32 to vector<16x128xf32>
    %7 = arith.maximumf %5, %6 : vector<16x128xf32>
    %8 = arith.truncf %7 : vector<16x128xf32> to vector<16x128xbf16>
    %c0_6 = arith.constant 0 : index
    %c0_7 = arith.constant 0 : index
    %9 = vector.load %arg4[%c0_6, %c0_7] : memref<128x128xbf16, #tpu.memory_space<vmem>>, vector<128x128xbf16>
    %cst_8 = arith.constant dense<0.000000e+00> : vector<16x128xf32>
    %10 = tpu.matmul %8, %9, %cst_8 {dimension_numbers = #tpu.dot_dimension_numbers<[1], [0], [0], [1], [0, 0, 1, 1], [], []>} : vector<16x128xbf16>, vector<128x128xbf16>, vector<16x128xf32> -> vector<16x128xf32>
    %c0_9 = arith.constant 0 : index
    %c0_10 = arith.constant 0 : index
    %11 = vector.load %arg5[%c0_9, %c0_10] : memref<1x128xf32, #tpu.memory_space<vmem>>, vector<1x128xf32>
    %12 = vector.broadcast %11 : vector<1x128xf32> to vector<16x128xf32>
    %13 = arith.addf %10, %12 : vector<16x128xf32>
    %c0_11 = arith.constant 0 : index
    %c0_12 = arith.constant 0 : index
    %14 = vector.load %arg6[%c0_11, %c0_12] : memref<16x128xf32, #tpu.memory_space<vmem>>, vector<16x128xf32>
    tpu.vector_store %arg6[%c0_11, %c0_12], %13 {strides = array<i32>} : memref<16x128xf32, #tpu.memory_space<vmem>>, vector<16x128xf32>,
    return
  }
  func.func @transform_0(%arg0: i32) -> (i32, i32) {
    %c0_i32 = arith.constant 0 : i32
    %c0_i32_0 = arith.constant 0 : i32
    return %arg0, %c0_i32 : i32, i32
  }
  func.func @transform_1(%arg0: i32) -> (i32, i32) {
    %c0_i32 = arith.constant 0 : i32
    %c0_i32_0 = arith.constant 0 : i32
    %c0_i32_1 = arith.constant 0 : i32
    return %c0_i32, %c0_i32_0 : i32, i32
  }
  func.func @transform_2(%arg0: i32) -> (i32, i32) {
    %c0_i32 = arith.constant 0 : i32
    %c0_i32_0 = arith.constant 0 : i32
    %c0_i32_1 = arith.constant 0 : i32
    return %c0_i32, %c0_i32_0 : i32, i32
  }
  func.func @transform_3(%arg0: i32) -> (i32, i32) {
    %c0_i32 = arith.constant 0 : i32
    %c0_i32_0 = arith.constant 0 : i32
    %c0_i32_1 = arith.constant 0 : i32
    return %c0_i32, %c0_i32_0 : i32, i32
  }
  func.func @transform_4(%arg0: i32) -> (i32, i32) {
    %c0_i32 = arith.constant 0 : i32
    %c0_i32_0 = arith.constant 0 : i32
    %c0_i32_1 = arith.constant 0 : i32
    return %c0_i32, %c0_i32_0 : i32, i32
  }
  func.func @transform_5(%arg0: i32) -> (i32, i32) {
    %c0_i32 = arith.constant 0 : i32
    %c0_i32_0 = arith.constant 0 : i32
    return %arg0, %c0_i32 : i32, i32
  }
}

</mosaic_0001>

<llo_original>
// kernel: tpu_custom_call.1
$region0: #{tpu_custom_call.1}
  #allocation0 [shape = 'u32[]', space=smem, size = 0x4, offset = 0x4, fixed_abs, tag = 'smem constant byte address 0x4 - core index']
  #allocation1 [shape = 'u32[144,128]{1,0:T(1,128)}', space=vmem, size = 0x12000, scoped, tag = 'internal scratch']
  %s0 = inlined_call_operand.hbm [shape: bf16[16,128], index: 0, kind: input, shape index: {}]
  %s1 = inlined_call_operand.hbm [shape: bf16[128,128], index: 1, kind: input, shape index: {}]
  %s2 = inlined_call_operand.vmem [shape: f32[1,128], index: 2, kind: input, shape index: {}]
  %s3 = inlined_call_operand.hbm [shape: bf16[128,128], index: 3, kind: input, shape index: {}]
  %s4 = inlined_call_operand.vmem [shape: f32[1,128], index: 4, kind: input, shape index: {}]
  %s5 = inlined_call_operand.hbm [shape: f32[16,128], index: 5, kind: output, shape index: {}]
  %s6 = sld [smem:[#allocation0]]
  $region42: #{tpu_custom_call.1} parent=0
    _
  %s8 = ssub.s32 1, %s6
  %s9 = scalar_select 0, %s8, %s6
  $region1: #{tpu_custom_call.1} parent=0
    #allocation2 [shape = 'u8[4096]{0}', space=vmem, size = 0x1000, scoped, tag = 'input window, operand 0, single buffered']
    #allocation3 [shape = 's32[1]{0}', space=sflag, size = 0x4, scoped, tag = 'scoped memory for tpu_custom_call.1']
    #allocation4 [shape = 's32[1]{0}', space=sflag, size = 0x4, scoped, tag = 'scoped memory for tpu_custom_call.1']
    #allocation5 [shape = 'u8[32768]{0}', space=vmem, size = 0x8000, scoped, tag = 'input window, operand 1, single buffered']
    #allocation6 [shape = 's32[1]{0}', space=sflag, size = 0x4, scoped, tag = 'scoped memory for tpu_custom_call.1']
    #allocation7 [shape = 'u8[32768]{0}', space=vmem, size = 0x8000, scoped, tag = 'input window, operand 3, single buffered']
    #allocation8 [shape = 'u8[8192]{0}', space=vmem, size = 0x2000, scoped, tag = 'output window, operand 0, single buffered']
    %10 = vsyncpa [#allocation3], 0
    %11 = vsyncpa [#allocation6], 0
    %12 = vsyncpa [#allocation4], 0
    // Predicated region
    $region2: #{tpu_custom_call.1} parent=1 // pred_check
      _
    $region3: #{tpu_custom_call.1} parent=1 // pred_check_branch
      %14 = sbr.rel (0) target = $region5
    $region4: #{tpu_custom_call.1} parent=1 // pred_region
      %s16 = ssub.s32 128, 128
      %17 = vsyncadd [#allocation3], %s16
      %s18 = sshll.u32 [#allocation2], 4
      %s19 = int_to_ptr.vmem [resolvable:$true] %s18
      %24 = dma.hbm_to_vmem [thread:$0]  %s0, 128, %s19, [#allocation3], 64, 64, 4
    $region5: #{tpu_custom_call.1} parent=1 // pred_fallthru
      _
    // Predicated region
    $region6: #{tpu_custom_call.1} parent=1 // pred_check
      _
    $region7: #{tpu_custom_call.1} parent=1 // pred_check_branch
      %26 = sbr.rel (0) target = $region9
    $region8: #{tpu_custom_call.1} parent=1 // pred_region
      %s28 = ssub.s32 1024, 1024
      %29 = vsyncadd [#allocation6], %s28
      %s30 = sshll.u32 [#allocation5], 4
      %s31 = int_to_ptr.vmem [resolvable:$true] %s30
      %36 = dma.hbm_to_vmem [thread:$0]  %s1, 1024, %s31, [#allocation6], 64, 64, 4
    $region9: #{tpu_custom_call.1} parent=1 // pred_fallthru
      _
    // Predicated region
    $region10: #{tpu_custom_call.1} parent=1 // pred_check
      _
    $region11: #{tpu_custom_call.1} parent=1 // pred_check_branch
      %38 = sbr.rel (0) target = $region13
    $region12: #{tpu_custom_call.1} parent=1 // pred_region
      _
    $region13: #{tpu_custom_call.1} parent=1 // pred_fallthru
      _
    // Predicated region
    $region14: #{tpu_custom_call.1} parent=1 // pred_check
      _
    $region15: #{tpu_custom_call.1} parent=1 // pred_check_branch
      %40 = sbr.rel (0) target = $region17
    $region16: #{tpu_custom_call.1} parent=1 // pred_region
      %s42 = ssub.s32 1024, 1024
      %43 = vsyncadd [#allocation6], %s42
      %s44 = sshll.u32 [#allocation7], 4
      %s45 = int_to_ptr.vmem [resolvable:$true] %s44
      %50 = dma.hbm_to_vmem [thread:$0]  %s3, 1024, %s45, [#allocation6], 64, 64, 4
    $region17: #{tpu_custom_call.1} parent=1 // pred_fallthru
      _
    // Predicated region
    $region18: #{tpu_custom_call.1} parent=1 // pred_check
      _
    $region19: #{tpu_custom_call.1} parent=1 // pred_check_branch
      %52 = sbr.rel (0) target = $region21
    $region20: #{tpu_custom_call.1} parent=1 // pred_region
      _
    $region21: #{tpu_custom_call.1} parent=1 // pred_fallthru
      _
    // Predicated region
    $region22: #{tpu_custom_call.1} parent=1 // pred_check
      _
    $region23: #{tpu_custom_call.1} parent=1 // pred_check_branch
      %54 = sbr.rel (0) target = $region25
    $region24: #{tpu_custom_call.1} parent=1 // pred_region
      %55 = dma.done [#allocation3], 128
    $region25: #{tpu_custom_call.1} parent=1 // pred_fallthru
      _
    // Predicated region
    $region26: #{tpu_custom_call.1} parent=1 // pred_check
      _
    $region27: #{tpu_custom_call.1} parent=1 // pred_check_branch
      %57 = sbr.rel (0) target = $region29
    $region28: #{tpu_custom_call.1} parent=1 // pred_region
      %58 = dma.done [#allocation6], 1024
    $region29: #{tpu_custom_call.1} parent=1 // pred_fallthru
      _
    // Predicated region
    $region30: #{tpu_custom_call.1} parent=1 // pred_check
      _
    $region31: #{tpu_custom_call.1} parent=1 // pred_check_branch
      %60 = sbr.rel (0) target = $region33
    $region32: #{tpu_custom_call.1} parent=1 // pred_region
      %61 = dma.done [#allocation6], 1024
    $region33: #{tpu_custom_call.1} parent=1 // pred_fallthru
      _
    %v63 = vld [vmem:[#allocation2] sm:$0xf]
    %v64 = vld [vmem:[#allocation2 + $0x4] sm:$0xf]
    %v65 = vld [vmem:[#allocation5] sm:$0xf]
    %v66 = vld [vmem:[#allocation5 + $0x4] sm:$0xf]
    %v67 = vld [vmem:[#allocation5 + $0x8] sm:$0xf]
    %v68 = vld [vmem:[#allocation5 + $0xc] sm:$0xf]
    %v69 = vld [vmem:[#allocation5 + $0x10] sm:$0xf]
    %v70 = vld [vmem:[#allocation5 + $0x14] sm:$0xf]
    %v71 = vld [vmem:[#allocation5 + $0x18] sm:$0xf]
    %v72 = vld [vmem:[#allocation5 + $0x1c] sm:$0xf]
    %v73 = vld [vmem:[#allocation5 + $0x20] sm:$0xf]
    %v74 = vld [vmem:[#allocation5 + $0x24] sm:$0xf]
    %v75 = vld [vmem:[#allocation5 + $0x28] sm:$0xf]
    %v76 = vld [vmem:[#allocation5 + $0x2c] sm:$0xf]
    %v77 = vld [vmem:[#allocation5 + $0x30] sm:$0xf]
    %v78 = vld [vmem:[#allocation5 + $0x34] sm:$0xf]
    %v79 = vld [vmem:[#allocation5 + $0x38] sm:$0xf]
    %v80 = vld [vmem:[#allocation5 + $0x3c] sm:$0xf]
    %v81 = vld [vmem:[%s2] sm:$0x1]
    %v83 = vlaneseq
    %v84 = vshrl.u32 %v83, 7
    %v85 = vsub.s32 0, %v84
    %v86 = vrot.slane %v81, %v85
    %v90 = vunpack.c.l.b16 %v63
    %v91 = vunpack.c.l.b16 %v64
    %v92 = vpack.c.b16 %v91, %v90
    %v110 = vunpack.c.l.b16 %v65
    %v111 = vunpack.c.l.b16 %v66
    %v112 = vunpack.c.l.b16 %v67
    %v113 = vunpack.c.l.b16 %v68
    %v114 = vunpack.c.l.b16 %v69
    %v115 = vunpack.c.l.b16 %v70
    %v116 = vunpack.c.l.b16 %v71
    %v117 = vunpack.c.l.b16 %v72
    %v118 = vunpack.c.l.b16 %v73
    %v119 = vunpack.c.l.b16 %v74
    %v120 = vunpack.c.l.b16 %v75
    %v121 = vunpack.c.l.b16 %v76
    %v122 = vunpack.c.l.b16 %v77
    %v123 = vunpack.c.l.b16 %v78
    %v124 = vunpack.c.l.b16 %v79
    %v125 = vunpack.c.l.b16 %v80
    %v126 = vpack.c.b16 %v111, %v110
    %v127 = vpack.c.b16 %v113, %v112
    %v128 = vpack.c.b16 %v115, %v114
    %v129 = vpack.c.b16 %v117, %v116
    %v130 = vpack.c.b16 %v119, %v118
    %v131 = vpack.c.b16 %v121, %v120
    %v132 = vpack.c.b16 %v123, %v122
    %v133 = vpack.c.b16 %v125, %v124
    %142 = vmatprep.subr.bf16.mxu0 0
    %143 = vmatpush1.bf16.msra.mxu0 %v126
    %144 = vmatprep.subr.bf16.mxu0 0
    %145 = vmatpush1.bf16.msra.mxu0 %v127
    %146 = vmatprep.subr.bf16.mxu0 0
    %147 = vmatpush1.bf16.msra.mxu0 %v128
    %148 = vmatprep.subr.bf16.mxu0 0
    %149 = vmatpush1.bf16.msra.mxu0 %v129
    %150 = vmatprep.subr.bf16.mxu0 0
    %151 = vmatpush1.bf16.msra.mxu0 %v130
    %152 = vmatprep.subr.bf16.mxu0 0
    %153 = vmatpush1.bf16.msra.mxu0 %v131
    %154 = vmatprep.subr.bf16.mxu0 0
    %155 = vmatpush1.bf16.msra.mxu0 %v132
    %156 = vmatprep.subr.bf16.mxu0 0
    %157 = vmatpush1.bf16.msra.mxu0 %v133
    %158 = vmatprep.subr.bf16.mxu0 0
    %159 = vmatpush1.bf16.msra.mxu0 0
    %160 = vmatprep.subr.bf16.mxu0 0
    %161 = vmatpush1.bf16.msra.mxu0 0
    %162 = vmatprep.subr.bf16.mxu0 0
    %163 = vmatpush1.bf16.msra.mxu0 0
    %164 = vmatprep.subr.bf16.mxu0 0
    %165 = vmatpush1.bf16.msra.mxu0 0
    %166 = vmatprep.subr.bf16.mxu0 0
    %167 = vmatpush1.bf16.msra.mxu0 0
    %168 = vmatprep.subr.bf16.mxu0 0
    %169 = vmatpush1.bf16.msra.mxu0 0
    %170 = vmatprep.subr.bf16.mxu0 0
    %171 = vmatpush1.bf16.msra.mxu0 0
    %172 = vmatprep.subr.bf16.mxu0 0
    %173 = vmatpush1.bf16.msra.mxu0 0
    %174 = vmatprep.mubr.bf16.mxu0 0
    %175 = vmatmul.mubr.bf16.gmra.mrb[0].mxu0 %v92
    %v176 = vpop.f32.mrb[0].mxu0
    %v177 = vadd.f32 %v86, %v176
    %v178 = vpop.f32.mrb[0].mxu0
    %v179 = vpop.f32.mrb[0].mxu0
    %v180 = vadd.f32 %v86, %v179
    %v181 = vpop.f32.mrb[0].mxu0
    %182 = vdwg.mxu0
    %v183 = vmax.f32 %v177, 0.0
    %v184 = vmax.f32 %v180, 0.0
    %v185 = vpack.c.bf16 %v184, %v183
    %v186 = vld [vmem:[#allocation7] sm:$0xf]
    %v187 = vld [vmem:[#allocation7 + $0x4] sm:$0xf]
    %v188 = vld [vmem:[#allocation7 + $0x8] sm:$0xf]
    %v189 = vld [vmem:[#allocation7 + $0xc] sm:$0xf]
    %v190 = vld [vmem:[#allocation7 + $0x10] sm:$0xf]
    %v191 = vld [vmem:[#allocation7 + $0x14] sm:$0xf]
    %v192 = vld [vmem:[#allocation7 + $0x18] sm:$0xf]
    %v193 = vld [vmem:[#allocation7 + $0x1c] sm:$0xf]
    %v194 = vld [vmem:[#allocation7 + $0x20] sm:$0xf]
    %v195 = vld [vmem:[#allocation7 + $0x24] sm:$0xf]
    %v196 = vld [vmem:[#allocation7 + $0x28] sm:$0xf]
    %v197 = vld [vmem:[#allocation7 + $0x2c] sm:$0xf]
    %v198 = vld [vmem:[#allocation7 + $0x30] sm:$0xf]
    %v199 = vld [vmem:[#allocation7 + $0x34] sm:$0xf]
    %v200 = vld [vmem:[#allocation7 + $0x38] sm:$0xf]
    %v201 = vld [vmem:[#allocation7 + $0x3c] sm:$0xf]
    %v202 = vld [vmem:[%s4] sm:$0x1]
    %v204 = vlaneseq
    %v205 = vshrl.u32 %v204, 7
    %v206 = vsub.s32 0, %v205
    %v207 = vrot.slane %v202, %v206
    %v225 = vunpack.c.l.b16 %v186
    %v226 = vunpack.c.l.b16 %v187
    %v227 = vunpack.c.l.b16 %v188
    %v228 = vunpack.c.l.b16 %v189
    %v229 = vunpack.c.l.b16 %v190
    %v230 = vunpack.c.l.b16 %v191
    %v231 = vunpack.c.l.b16 %v192
    %v232 = vunpack.c.l.b16 %v193
    %v233 = vunpack.c.l.b16 %v194
    %v234 = vunpack.c.l.b16 %v195
    %v235 = vunpack.c.l.b16 %v196
    %v236 = vunpack.c.l.b16 %v197
    %v237 = vunpack.c.l.b16 %v198
    %v238 = vunpack.c.l.b16 %v199
    %v239 = vunpack.c.l.b16 %v200
    %v240 = vunpack.c.l.b16 %v201
    %v241 = vpack.c.b16 %v226, %v225
    %v242 = vpack.c.b16 %v228, %v227
    %v243 = vpack.c.b16 %v230, %v229
    %v244 = vpack.c.b16 %v232, %v231
    %v245 = vpack.c.b16 %v234, %v233
    %v246 = vpack.c.b16 %v236, %v235
    %v247 = vpack.c.b16 %v238, %v237
    %v248 = vpack.c.b16 %v240, %v239
    %257 = vmatprep.subr.bf16.mxu0 0
    %258 = vmatpush1.bf16.msra.mxu0 %v241
    %259 = vmatprep.subr.bf16.mxu0 0
    %260 = vmatpush1.bf16.msra.mxu0 %v242
    %261 = vmatprep.subr.bf16.mxu0 0
    %262 = vmatpush1.bf16.msra.mxu0 %v243
    %263 = vmatprep.subr.bf16.mxu0 0
    %264 = vmatpush1.bf16.msra.mxu0 %v244
    %265 = vmatprep.subr.bf16.mxu0 0
    %266 = vmatpush1.bf16.msra.mxu0 %v245
    %267 = vmatprep.subr.bf16.mxu0 0
    %268 = vmatpush1.bf16.msra.mxu0 %v246
    %269 = vmatprep.subr.bf16.mxu0 0
    %270 = vmatpush1.bf16.msra.mxu0 %v247
    %271 = vmatprep.subr.bf16.mxu0 0
    %272 = vmatpush1.bf16.msra.mxu0 %v248
    %273 = vmatprep.subr.bf16.mxu0 0
    %274 = vmatpush1.bf16.msra.mxu0 0
    %275 = vmatprep.subr.bf16.mxu0 0
    %276 = vmatpush1.bf16.msra.mxu0 0
    %277 = vmatprep.subr.bf16.mxu0 0
    %278 = vmatpush1.bf16.msra.mxu0 0
    %279 = vmatprep.subr.bf16.mxu0 0
    %280 = vmatpush1.bf16.msra.mxu0 0
    %281 = vmatprep.subr.bf16.mxu0 0
    %282 = vmatpush1.bf16.msra.mxu0 0
    %283 = vmatprep.subr.bf16.mxu0 0
    %284 = vmatpush1.bf16.msra.mxu0 0
    %285 = vmatprep.subr.bf16.mxu0 0
    %286 = vmatpush1.bf16.msra.mxu0 0
    %287 = vmatprep.subr.bf16.mxu0 0
    %288 = vmatpush1.bf16.msra.mxu0 0
    %289 = vmatprep.mubr.bf16.mxu0 0
    %290 = vmatmul.mubr.bf16.gmra.mrb[0].mxu0 %v185
    %v291 = vpop.f32.mrb[0].mxu0
    %v292 = vadd.f32 %v207, %v291
    %v293 = vpop.f32.mrb[0].mxu0
    %v294 = vpop.f32.mrb[0].mxu0
    %v295 = vadd.f32 %v207, %v294
    %v296 = vpop.f32.mrb[0].mxu0
    %297 = vdwg.mxu0
    %298 = vst [vmem:[#allocation8] sm:$0xff] %v292
    %299 = vst [vmem:[#allocation8 + $0x8] sm:$0xff] %v295
    // Predicated region
    $region34: #{tpu_custom_call.1} parent=1 // pred_check
      _
    $region35: #{tpu_custom_call.1} parent=1 // pred_check_branch
      %301 = sbr.rel (0) target = $region37
    $region36: #{tpu_custom_call.1} parent=1 // pred_region
      %s303 = ssub.s32 256, 256
      %304 = vsyncadd [#allocation4], %s303
      %s305 = sshll.u32 [#allocation8], 4
      %s306 = int_to_ptr.vmem [resolvable:$true] %s305
      %311 = dma.vmem_to_hbm [thread:$0]  %s306, 256, %s5, [#allocation4], 128, 128, 8
    $region37: #{tpu_custom_call.1} parent=1 // pred_fallthru
      _
    // Predicated region
    $region38: #{tpu_custom_call.1} parent=1 // pred_check
      _
    $region39: #{tpu_custom_call.1} parent=1 // pred_check_branch
      %313 = sbr.rel (0) target = $region41
    $region40: #{tpu_custom_call.1} parent=1 // pred_region
      %314 = dma.done [#allocation4], 256
    $region41: #{tpu_custom_call.1} parent=1 // pred_fallthru
      _
    %315 = vsyncpa [#allocation3], 1
    %316 = vsyncpa [#allocation6], 1
    %317 = vsyncpa [#allocation4], 1

// kernel: tpu_custom_call.1
$region0: #{tpu_custom_call.1}
  #allocation0 [shape = 'u32[]', space=smem, size = 0x4, offset = 0x4, fixed_abs, tag = 'smem constant byte address 0x4 - core index']
  #allocation1 [shape = 'u32[144,128]{1,0:T(1,128)}', space=vmem, size = 0x12000, scoped, tag = 'internal scratch']
  %s0 = inlined_call_operand.hbm [shape: bf16[16,128], index: 0, kind: input, shape index: {}]
  %s1 = inlined_call_operand.hbm [shape: bf16[128,128], index: 1, kind: input, shape index: {}]
  %s2 = inlined_call_operand.vmem [shape: f32[1,128], index: 2, kind: input, shape index: {}]
  %s3 = inlined_call_operand.hbm [shape: bf16[128,128], index: 3, kind: input, shape index: {}]
  %s4 = inlined_call_operand.vmem [shape: f32[1,128], index: 4, kind: input, shape index: {}]
  %s5 = inlined_call_operand.hbm [shape: f32[16,128], index: 5, kind: output, shape index: {}]
  %s6 = sld [smem:[#allocation0]]
  $region42: #{tpu_custom_call.1} parent=0
    _
  %s8 = ssub.s32 1, %s6
  %s9 = scalar_select 0, %s8, %s6
  $region1: #{tpu_custom_call.1} parent=0
    #allocation2 [shape = 'u8[4096]{0}', space=vmem, size = 0x1000, scoped, tag = 'input window, operand 0, single buffered']
    #allocation3 [shape = 's32[1]{0}', space=sflag, size = 0x4, scoped, tag = 'scoped memory for tpu_custom_call.1']
    #allocation4 [shape = 's32[1]{0}', space=sflag, size = 0x4, scoped, tag = 'scoped memory for tpu_custom_call.1']
    #allocation5 [shape = 'u8[32768]{0}', space=vmem, size = 0x8000, scoped, tag = 'input window, operand 1, single buffered']
    #allocation6 [shape = 's32[1]{0}', space=sflag, size = 0x4, scoped, tag = 'scoped memory for tpu_custom_call.1']
    #allocation7 [shape = 'u8[32768]{0}', space=vmem, size = 0x8000, scoped, tag = 'input window, operand 3, single buffered']
    #allocation8 [shape = 'u8[8192]{0}', space=vmem, size = 0x2000, scoped, tag = 'output window, operand 0, single buffered']
    %10 = vsyncpa [#allocation3], 0
    %11 = vsyncpa [#allocation6], 0
    %12 = vsyncpa [#allocation4], 0
    // Predicated region
    $region2: #{tpu_custom_call.1} parent=1 // pred_check
      _
    $region3: #{tpu_custom_call.1} parent=1 // pred_check_branch
      %14 = sbr.rel (0) target = $region5
    $region4: #{tpu_custom_call.1} parent=1 // pred_region
      %s16 = ssub.s32 128, 128
      %17 = vsyncadd [#allocation3], %s16
      %s18 = sshll.u32 [#allocation2], 4
      %s19 = int_to_ptr.vmem [resolvable:$true] %s18
      %24 = dma.hbm_to_vmem [thread:$0]  %s0, 128, %s19, [#allocation3], 64, 64, 4
    $region5: #{tpu_custom_call.1} parent=1 // pred_fallthru
      _
    // Predicated region
    $region6: #{tpu_custom_call.1} parent=1 // pred_check
      _
    $region7: #{tpu_custom_call.1} parent=1 // pred_check_branch
      %26 = sbr.rel (0) target = $region9
    $region8: #{tpu_custom_call.1} parent=1 // pred_region
      %s28 = ssub.s32 1024, 1024
      %29 = vsyncadd [#allocation6], %s28
      %s30 = sshll.u32 [#allocation5], 4
      %s31 = int_to_ptr.vmem [resolvable:$true] %s30
      %36 = dma.hbm_to_vmem [thread:$0]  %s1, 1024, %s31, [#allocation6], 64, 64, 4
    $region9: #{tpu_custom_call.1} parent=1 // pred_fallthru
      _
    // Predicated region
    $region10: #{tpu_custom_call.1} parent=1 // pred_check
      _
    $region11: #{tpu_custom_call.1} parent=1 // pred_check_branch
      %38 = sbr.rel (0) target = $region13
    $region12: #{tpu_custom_call.1} parent=1 // pred_region
      _
    $region13: #{tpu_custom_call.1} parent=1 // pred_fallthru
      _
    // Predicated region
    $region14: #{tpu_custom_call.1} parent=1 // pred_check
      _
    $region15: #{tpu_custom_call.1} parent=1 // pred_check_branch
      %40 = sbr.rel (0) target = $region17
    $region16: #{tpu_custom_call.1} parent=1 // pred_region
      %s42 = ssub.s32 1024, 1024
      %43 = vsyncadd [#allocation6], %s42
      %s44 = sshll.u32 [#allocation7], 4
      %s45 = int_to_ptr.vmem [resolvable:$true] %s44
      %50 = dma.hbm_to_vmem [thread:$0]  %s3, 1024, %s45, [#allocation6], 64, 64, 4
    $region17: #{tpu_custom_call.1} parent=1 // pred_fallthru
      _
    // Predicated region
    $region18: #{tpu_custom_call.1} parent=1 // pred_check
      _
    $region19: #{tpu_custom_call.1} parent=1 // pred_check_branch
      %52 = sbr.rel (0) target = $region21
    $region20: #{tpu_custom_call.1} parent=1 // pred_region
      _
    $region21: #{tpu_custom_call.1} parent=1 // pred_fallthru
      _
    // Predicated region
    $region22: #{tpu_custom_call.1} parent=1 // pred_check
      _
    $region23: #{tpu_custom_call.1} parent=1 // pred_check_branch
      %54 = sbr.rel (0) target = $region25
    $region24: #{tpu_custom_call.1} parent=1 // pred_region
      %55 = dma.done [#allocation3], 128
    $region25: #{tpu_custom_call.1} parent=1 // pred_fallthru
      _
    // Predicated region
    $region26: #{tpu_custom_call.1} parent=1 // pred_check
      _
    $region27: #{tpu_custom_call.1} parent=1 // pred_check_branch
      %57 = sbr.rel (0) target = $region29
    $region28: #{tpu_custom_call.1} parent=1 // pred_region
      %58 = dma.done [#allocation6], 1024
    $region29: #{tpu_custom_call.1} parent=1 // pred_fallthru
      _
    // Predicated region
    $region30: #{tpu_custom_call.1} parent=1 // pred_check
      _
    $region31: #{tpu_custom_call.1} parent=1 // pred_check_branch
      %60 = sbr.rel (0) target = $region33
    $region32: #{tpu_custom_call.1} parent=1 // pred_region
      %61 = dma.done [#allocation6], 1024
    $region33: #{tpu_custom_call.1} parent=1 // pred_fallthru
      _
    %v63 = vld [vmem:[#allocation2] sm:$0xf]
    %v64 = vld [vmem:[#allocation2 + $0x4] sm:$0xf]
    %v65 = vld [vmem:[#allocation5] sm:$0xf]
    %v66 = vld [vmem:[#allocation5 + $0x4] sm:$0xf]
    %v67 = vld [vmem:[#allocation5 + $0x8] sm:$0xf]
    %v68 = vld [vmem:[#allocation5 + $0xc] sm:$0xf]
    %v69 = vld [vmem:[#allocation5 + $0x10] sm:$0xf]
    %v70 = vld [vmem:[#allocation5 + $0x14] sm:$0xf]
    %v71 = vld [vmem:[#allocation5 + $0x18] sm:$0xf]
    %v72 = vld [vmem:[#allocation5 + $0x1c] sm:$0xf]
    %v73 = vld [vmem:[#allocation5 + $0x20] sm:$0xf]
    %v74 = vld [vmem:[#allocation5 + $0x24] sm:$0xf]
    %v75 = vld [vmem:[#allocation5 + $0x28] sm:$0xf]
    %v76 = vld [vmem:[#allocation5 + $0x2c] sm:$0xf]
    %v77 = vld [vmem:[#allocation5 + $0x30] sm:$0xf]
    %v78 = vld [vmem:[#allocation5 + $0x34] sm:$0xf]
    %v79 = vld [vmem:[#allocation5 + $0x38] sm:$0xf]
    %v80 = vld [vmem:[#allocation5 + $0x3c] sm:$0xf]
    %v81 = vld [vmem:[%s2] sm:$0x1]
    %v83 = vlaneseq
    %v84 = vshrl.u32 %v83, 7
    %v85 = vsub.s32 0, %v84
    %v86 = vrot.slane %v81, %v85
    %v90 = vunpack.c.l.b16 %v63
    %v91 = vunpack.c.l.b16 %v64
    %v92 = vpack.c.b16 %v91, %v90
    %v110 = vunpack.c.l.b16 %v65
    %v111 = vunpack.c.l.b16 %v66
    %v112 = vunpack.c.l.b16 %v67
    %v113 = vunpack.c.l.b16 %v68
    %v114 = vunpack.c.l.b16 %v69
    %v115 = vunpack.c.l.b16 %v70
    %v116 = vunpack.c.l.b16 %v71
    %v117 = vunpack.c.l.b16 %v72
    %v118 = vunpack.c.l.b16 %v73
    %v119 = vunpack.c.l.b16 %v74
    %v120 = vunpack.c.l.b16 %v75
    %v121 = vunpack.c.l.b16 %v76
    %v122 = vunpack.c.l.b16 %v77
    %v123 = vunpack.c.l.b16 %v78
    %v124 = vunpack.c.l.b16 %v79
    %v125 = vunpack.c.l.b16 %v80
    %v126 = vpack.c.b16 %v111, %v110
    %v127 = vpack.c.b16 %v113, %v112
    %v128 = vpack.c.b16 %v115, %v114
    %v129 = vpack.c.b16 %v117, %v116
    %v130 = vpack.c.b16 %v119, %v118
    %v131 = vpack.c.b16 %v121, %v120
    %v132 = vpack.c.b16 %v123, %v122
    %v133 = vpack.c.b16 %v125, %v124
    %142 = vmatprep.subr.bf16.mxu0 0
    %143 = vmatpush1.bf16.msra.mxu0 %v126
    %144 = vmatprep.subr.bf16.mxu0 0
    %145 = vmatpush1.bf16.msra.mxu0 %v127
    %146 = vmatprep.subr.bf16.mxu0 0
    %147 = vmatpush1.bf16.msra.mxu0 %v128
    %148 = vmatprep.subr.bf16.mxu0 0
    %149 = vmatpush1.bf16.msra.mxu0 %v129
    %150 = vmatprep.subr.bf16.mxu0 0
    %151 = vmatpush1.bf16.msra.mxu0 %v130
    %152 = vmatprep.subr.bf16.mxu0 0
    %153 = vmatpush1.bf16.msra.mxu0 %v131
    %154 = vmatprep.subr.bf16.mxu0 0
    %155 = vmatpush1.bf16.msra.mxu0 %v132
    %156 = vmatprep.subr.bf16.mxu0 0
    %157 = vmatpush1.bf16.msra.mxu0 %v133
    %158 = vmatprep.subr.bf16.mxu0 0
    %159 = vmatpush1.bf16.msra.mxu0 0
    %160 = vmatprep.subr.bf16.mxu0 0
    %161 = vmatpush1.bf16.msra.mxu0 0
    %162 = vmatprep.subr.bf16.mxu0 0
    %163 = vmatpush1.bf16.msra.mxu0 0
    %164 = vmatprep.subr.bf16.mxu0 0
    %165 = vmatpush1.bf16.msra.mxu0 0
    %166 = vmatprep.subr.bf16.mxu0 0
    %167 = vmatpush1.bf16.msra.mxu0 0
    %168 = vmatprep.subr.bf16.mxu0 0
    %169 = vmatpush1.bf16.msra.mxu0 0
    %170 = vmatprep.subr.bf16.mxu0 0
    %171 = vmatpush1.bf16.msra.mxu0 0
    %172 = vmatprep.subr.bf16.mxu0 0
    %173 = vmatpush1.bf16.msra.mxu0 0
    %174 = vmatprep.mubr.bf16.mxu0 0
    %175 = vmatmul.mubr.bf16.gmra.mrb[0].mxu0 %v92
    %v176 = vpop.f32.mrb[0].mxu0
    %v177 = vadd.f32 %v86, %v176
    %v178 = vpop.f32.mrb[0].mxu0
    %v179 = vpop.f32.mrb[0].mxu0
    %v180 = vadd.f32 %v86, %v179
    %v181 = vpop.f32.mrb[0].mxu0
    %182 = vdwg.mxu0
    %v183 = vmax.f32 %v177, 0.0
    %v184 = vmax.f32 %v180, 0.0
    %v185 = vpack.c.bf16 %v184, %v183
    %v186 = vld [vmem:[#allocation7] sm:$0xf]
    %v187 = vld [vmem:[#allocation7 + $0x4] sm:$0xf]
    %v188 = vld [vmem:[#allocation7 + $0x8] sm:$0xf]
    %v189 = vld [vmem:[#allocation7 + $0xc] sm:$0xf]
    %v190 = vld [vmem:[#allocation7 + $0x10] sm:$0xf]
    %v191 = vld [vmem:[#allocation7 + $0x14] sm:$0xf]
    %v192 = vld [vmem:[#allocation7 + $0x18] sm:$0xf]
    %v193 = vld [vmem:[#allocation7 + $0x1c] sm:$0xf]
    %v194 = vld [vmem:[#allocation7 + $0x20] sm:$0xf]
    %v195 = vld [vmem:[#allocation7 + $0x24] sm:$0xf]
    %v196 = vld [vmem:[#allocation7 + $0x28] sm:$0xf]
    %v197 = vld [vmem:[#allocation7 + $0x2c] sm:$0xf]
    %v198 = vld [vmem:[#allocation7 + $0x30] sm:$0xf]
    %v199 = vld [vmem:[#allocation7 + $0x34] sm:$0xf]
    %v200 = vld [vmem:[#allocation7 + $0x38] sm:$0xf]
    %v201 = vld [vmem:[#allocation7 + $0x3c] sm:$0xf]
    %v202 = vld [vmem:[%s4] sm:$0x1]
    %v204 = vlaneseq
    %v205 = vshrl.u32 %v204, 7
    %v206 = vsub.s32 0, %v205
    %v207 = vrot.slane %v202, %v206
    %v225 = vunpack.c.l.b16 %v186
    %v226 = vunpack.c.l.b16 %v187
    %v227 = vunpack.c.l.b16 %v188
    %v228 = vunpack.c.l.b16 %v189
    %v229 = vunpack.c.l.b16 %v190
    %v230 = vunpack.c.l.b16 %v191
    %v231 = vunpack.c.l.b16 %v192
    %v232 = vunpack.c.l.b16 %v193
    %v233 = vunpack.c.l.b16 %v194
    %v234 = vunpack.c.l.b16 %v195
    %v235 = vunpack.c.l.b16 %v196
    %v236 = vunpack.c.l.b16 %v197
    %v237 = vunpack.c.l.b16 %v198
    %v238 = vunpack.c.l.b16 %v199
    %v239 = vunpack.c.l.b16 %v200
    %v240 = vunpack.c.l.b16 %v201
    %v241 = vpack.c.b16 %v226, %v225
    %v242 = vpack.c.b16 %v228, %v227
    %v243 = vpack.c.b16 %v230, %v229
    %v244 = vpack.c.b16 %v232, %v231
    %v245 = vpack.c.b16 %v234, %v233
    %v246 = vpack.c.b16 %v236, %v235
    %v247 = vpack.c.b16 %v238, %v237
    %v248 = vpack.c.b16 %v240, %v239
    %257 = vmatprep.subr.bf16.mxu0 0
    %258 = vmatpush1.bf16.msra.mxu0 %v241
    %259 = vmatprep.subr.bf16.mxu0 0
    %260 = vmatpush1.bf16.msra.mxu0 %v242
    %261 = vmatprep.subr.bf16.mxu0 0
    %262 = vmatpush1.bf16.msra.mxu0 %v243
    %263 = vmatprep.subr.bf16.mxu0 0
    %264 = vmatpush1.bf16.msra.mxu0 %v244
    %265 = vmatprep.subr.bf16.mxu0 0
    %266 = vmatpush1.bf16.msra.mxu0 %v245
    %267 = vmatprep.subr.bf16.mxu0 0
    %268 = vmatpush1.bf16.msra.mxu0 %v246
    %269 = vmatprep.subr.bf16.mxu0 0
    %270 = vmatpush1.bf16.msra.mxu0 %v247
    %271 = vmatprep.subr.bf16.mxu0 0
    %272 = vmatpush1.bf16.msra.mxu0 %v248
    %273 = vmatprep.subr.bf16.mxu0 0
    %274 = vmatpush1.bf16.msra.mxu0 0
    %275 = vmatprep.subr.bf16.mxu0 0
    %276 = vmatpush1.bf16.msra.mxu0 0
    %277 = vmatprep.subr.bf16.mxu0 0
    %278 = vmatpush1.bf16.msra.mxu0 0
    %279 = vmatprep.subr.bf16.mxu0 0
    %280 = vmatpush1.bf16.msra.mxu0 0
    %281 = vmatprep.subr.bf16.mxu0 0
    %282 = vmatpush1.bf16.msra.mxu0 0
    %283 = vmatprep.subr.bf16.mxu0 0
    %284 = vmatpush1.bf16.msra.mxu0 0
    %285 = vmatprep.subr.bf16.mxu0 0
    %286 = vmatpush1.bf16.msra.mxu0 0
    %287 = vmatprep.subr.bf16.mxu0 0
    %288 = vmatpush1.bf16.msra.mxu0 0
    %289 = vmatprep.mubr.bf16.mxu0 0
    %290 = vmatmul.mubr.bf16.gmra.mrb[0].mxu0 %v185
    %v291 = vpop.f32.mrb[0].mxu0
    %v292 = vadd.f32 %v207, %v291
    %v293 = vpop.f32.mrb[0].mxu0
    %v294 = vpop.f32.mrb[0].mxu0
    %v295 = vadd.f32 %v207, %v294
    %v296 = vpop.f32.mrb[0].mxu0
    %297 = vdwg.mxu0
    %298 = vst [vmem:[#allocation8] sm:$0xff] %v292
    %299 = vst [vmem:[#allocation8 + $0x8] sm:$0xff] %v295
    // Predicated region
    $region34: #{tpu_custom_call.1} parent=1 // pred_check
      _
    $region35: #{tpu_custom_call.1} parent=1 // pred_check_branch
      %301 = sbr.rel (0) target = $region37
    $region36: #{tpu_custom_call.1} parent=1 // pred_region
      %s303 = ssub.s32 256, 256
      %304 = vsyncadd [#allocation4], %s303
      %s305 = sshll.u32 [#allocation8], 4
      %s306 = int_to_ptr.vmem [resolvable:$true] %s305
      %311 = dma.vmem_to_hbm [thread:$0]  %s306, 256, %s5, [#allocation4], 128, 128, 8
    $region37: #{tpu_custom_call.1} parent=1 // pred_fallthru
      _
    // Predicated region
    $region38: #{tpu_custom_call.1} parent=1 // pred_check
      _
    $region39: #{tpu_custom_call.1} parent=1 // pred_check_branch
      %313 = sbr.rel (0) target = $region41
    $region40: #{tpu_custom_call.1} parent=1 // pred_region
      %314 = dma.done [#allocation4], 256
    $region41: #{tpu_custom_call.1} parent=1 // pred_fallthru
      _
    %315 = vsyncpa [#allocation3], 1
    %316 = vsyncpa [#allocation6], 1
    %317 = vsyncpa [#allocation4], 1

</llo_original>
